<compile_context>
chip_gen: v7x
topology: tpu7x:2x2x1
jax: 0.10.0
libtpu: 0.0.40
codegen_flags: <defaults>
</compile_context>

<pallas_src>
import functools

import jax
import jax.numpy as jnp
from jax import lax
from jax.experimental import pallas as pl
from jax.experimental.pallas import tpu as pltpu

_LANE = 128
_SUBLANE = 8
_MAX_TILE_R = 2048              # 2048 * 128 * 4B = 1 MiB per f32 input block
_VMEM_LIMIT = 32 * 1024 * 1024  # explicit scoped-VMEM budget (safe on v5e/v6e/v7x)


def _round_up(x, m):
    return ((x + m - 1) // m) * m


def _sublane_multiple(dtype):
    # Minimum second-to-last tile dim for this dtype: 8 (f32), 16 (bf16), 32 (int8).
    return max(_SUBLANE, 32 // jnp.dtype(dtype).itemsize)


def _dice_partial_kernel(pred_ref, mask_ref, inter_out_ref, denom_out_ref,
                         inter_acc, denom_acc, *,
                         tile_r, nk_per_split, n_rows, need_mask):
    """grid = (n_split, b, nk_per_split); the reduction (k) axis is innermost.

    For each (split, batch) pair, accumulate lane-wise partial sums over the
    reduction tiles; dump the (8,128) accumulators at the last k step."""
    s = pl.program_id(0)
    k = pl.program_id(2)

    @pl.when(k == 0)
    def _():
        inter_acc[...] = jnp.zeros_like(inter_acc)
        denom_acc[...] = jnp.zeros_like(denom_acc)

    p = pred_ref[0].astype(jnp.float32)   # (tile_r, 128)
    m = mask_ref[0].astype(jnp.float32)   # (tile_r, 128)

    if need_mask:
        # Zero out rows beyond the true row count (tail of the last partial
        # tile and any clamped duplicate tiles).  Pure VPU selects; exact for
        # all three sums (intersection, sum(p), sum(m)).
        start = (s * nk_per_split + k) * tile_r
        rows = lax.broadcasted_iota(jnp.int32, (tile_r, _LANE), 0)
        valid = (rows + start) < n_rows
        p = jnp.where(valid, p, 0.0)
        m = jnp.where(valid, m, 0.0)

    # Regroup whole (8,128) vregs along a leading axis; the axis-0 sums below
    # lower to per-vreg VPU adds (no XLU work, no lane/sublane movement).
    p3 = p.reshape(tile_r // _SUBLANE, _SUBLANE, _LANE)
    m3 = m.reshape(tile_r // _SUBLANE, _SUBLANE, _LANE)
    inter_acc[...] += jnp.sum(p3 * m3, axis=0)
    denom_acc[...] += jnp.sum(p3 + m3, axis=0)   # fused sum(p) + sum(m)

    @pl.when(k == nk_per_split - 1)
    def _():
        inter_out_ref[0, 0] = inter_acc[...]
        denom_out_ref[0, 0] = denom_acc[...]


@jax.jit
def dice_loss(pred, mask):
    """pred, mask: [b, c, h, w] -> scalar dice loss (float32)."""
    assert pred.shape == mask.shape
    b = pred.shape[0]
    n = 1
    for d in pred.shape[1:]:
        n *= d

    mult = max(_sublane_multiple(pred.dtype), _sublane_multiple(mask.dtype))

    # Reshape to [b, r, 128] (lane-dense).  Free (no HBM copy) when
    # n % 128 == 0; otherwise fall back to a minimal zero pad to a full lane row.
    if n % _LANE == 0:
        r = n // _LANE

        def prep(x):
            return x.reshape(b, r, _LANE)
    else:
        n_pad = _round_up(n, _LANE)
        r = n_pad // _LANE

        def prep(x):
            x2 = x.reshape(b, n)
            x2 = jnp.pad(x2, ((0, 0), (0, n_pad - n)))
            return x2.reshape(b, r, _LANE)

    tile_r = min(_MAX_TILE_R, _round_up(r, mult))
    nk_total = pl.cdiv(r, tile_r)

    # Split the reduction over a leading "parallel" grid axis when the batch
    # alone can't keep both v7x TensorCores busy (odd b, e.g. b == 1).
    n_split = 2 if (b % 2 == 1 and nk_total >= 2) else 1
    nk_per_split = pl.cdiv(nk_total, n_split)

    clamp = (n_split * nk_per_split) != nk_total
    need_mask = clamp or (r % tile_r != 0)

    def in_index_map(s, i, k):
        blk = s * nk_per_split + k
        if clamp:
            # Duplicate the last real tile for out-of-range steps; the kernel
            # masks it to zero so the sums stay exact.
            blk = jnp.minimum(blk, nk_total - 1)
        return (i, blk, 0)

    bs_kwargs = {}
    if nk_per_split >= 4:
        # Deeper input pipelining mainly helps on v7x where per-block DMA is
        # short relative to per-step issue overhead.
        bs_kwargs = dict(pipeline_mode=pl.Buffered(3))

    in_specs = [
        pl.BlockSpec((1, tile_r, _LANE), in_index_map, **bs_kwargs),
        pl.BlockSpec((1, tile_r, _LANE), in_index_map, **bs_kwargs),
    ]
    out_specs = [
        pl.BlockSpec((1, 1, _SUBLANE, _LANE), lambda s, i, k: (s, i, 0, 0)),
        pl.BlockSpec((1, 1, _SUBLANE, _LANE), lambda s, i, k: (s, i, 0, 0)),
    ]
    out_shape = (
        jax.ShapeDtypeStruct((n_split, b, _SUBLANE, _LANE), jnp.float32),
        jax.ShapeDtypeStruct((n_split, b, _SUBLANE, _LANE), jnp.float32),
    )

    kernel = functools.partial(
        _dice_partial_kernel,
        tile_r=tile_r, nk_per_split=nk_per_split, n_rows=r, need_mask=need_mask)

    inter_out, denom_out = pl.pallas_call(
        kernel,
        out_shape=out_shape,
        grid_spec=pltpu.PrefetchScalarGridSpec(
            num_scalar_prefetch=0,
            grid=(n_split, b, nk_per_split),
            in_specs=in_specs,
            out_specs=out_specs,
            scratch_shapes=[
                pltpu.VMEM((_SUBLANE, _LANE), jnp.float32),  # intersection partials
                pltpu.VMEM((_SUBLANE, _LANE), jnp.float32),  # sum(p)+sum(m) partials
            ],
        ),
        compiler_params=pltpu.CompilerParams(
            # split/batch axes shard across TensorCores; the reduction axis is
            # innermost and "arbitrary" so each core's accumulators are correct.
            dimension_semantics=("parallel", "parallel", "arbitrary"),
            vmem_limit_bytes=_VMEM_LIMIT,
        ),
    )(prep(pred), prep(mask))

    # Combine partial sums and apply the dice formula on tiny (b,) vectors.
    intersection = jnp.sum(inter_out, axis=(0, 2, 3))   # (b,)
    denom = jnp.sum(denom_out, axis=(0, 2, 3))          # (b,)
    dice_per_class = 1.0 - (2.0 * intersection + 1.0) / (denom + 1.0)
    return jnp.sum(dice_per_class) / b


def _dice_loss_ref(pred, mask):
    """Pure-JAX reference matching the PyTorch forward exactly."""
    intersection = pred * mask
    dice_per_class = 1.0 - (2.0 * jnp.sum(intersection, axis=(1, 2, 3)) + 1.0) / (
        jnp.sum(pred, axis=(1, 2, 3)) + jnp.sum(mask, axis=(1, 2, 3)) + 1.0
    )
    return jnp.sum(dice_per_class, axis=0) / pred.shape[0]


if __name__ == "__main__":
    key = jax.random.PRNGKey(0)
    keys = jax.random.split(key, 5)

    def run_case(shape, seed_key, pred_dtype=jnp.float32, mask_dtype=jnp.float32):
        kp, km = jax.random.split(seed_key)
        pred = jax.nn.sigmoid(
            jax.random.normal(kp, shape, dtype=jnp.float32)).astype(pred_dtype)
        mask = (jax.random.uniform(km, shape) > 0.5).astype(mask_dtype)
        loss = jax.block_until_ready(dice_loss(pred, mask))
        ref = jax.block_until_ready(
            _dice_loss_ref(pred.astype(jnp.float32), mask.astype(jnp.float32)))
        assert jnp.allclose(loss, ref, rtol=1e-4, atol=1e-5), (shape, loss, ref)

    # Primary small case (matches the module's [b, c, x, y] contract).
    run_case((2, 4, 16, 16), keys[0])
    # Tail-masking path, no pad (n % 128 == 0 but rows not a multiple of the tile).
    run_case((1, 5, 8, 16), keys[1])
    # Fallback lane-pad path (n % 128 != 0).
    run_case((1, 3, 7, 9), keys[2])
    # Multi-tile reduction with odd batch -> reduction split over the parallel axis.
    run_case((1, 40, 128, 128), keys[3])
    # bf16 predictions (narrow-dtype path, in-kernel f32 accumulation).
    run_case((2, 4, 32, 32), keys[4], pred_dtype=jnp.bfloat16)

    print("KERNEL_OK")
</pallas_src>

<mosaic_0001>
module attributes {stable_mosaic.version = 11 : i64} {
  func.func @_dice_partial_kernel(%arg0: i32, %arg1: i32, %arg2: i32, %arg3: memref<1x8x128xf32, #tpu.memory_space<vmem>>, %arg4: memref<1x8x128xf32, #tpu.memory_space<vmem>>, %arg5: memref<1x1x8x128xf32, #tpu.memory_space<vmem>>, %arg6: memref<1x1x8x128xf32, #tpu.memory_space<vmem>>, %arg7: memref<8x128xf32, #tpu.memory_space<vmem>>, %arg8: memref<8x128xf32, #tpu.memory_space<vmem>>) attributes {dimension_semantics = [#tpu.dimension_semantics<parallel>, #tpu.dimension_semantics<parallel>, #tpu.dimension_semantics<arbitrary>], iteration_bounds = array<i64: 1, 2, 1>, scalar_prefetch = 0 : i64, scratch_operands = 2 : i64, tpu.core_type = #tpu.core_type<tc>, window_params = [{transform_indices = @transform_0, window_bounds = array<i64: 1, 8, 128>}, {transform_indices = @transform_1, window_bounds = array<i64: 1, 8, 128>}, {transform_indices = @transform_2, window_bounds = array<i64: 1, 1, 8, 128>}, {transform_indices = @transform_3, window_bounds = array<i64: 1, 1, 8, 128>}]} {
    %c0_i32 = arith.constant 0 : i32
    %0 = arith.cmpi eq, %arg2, %c0_i32 : i32
    %1 = arith.extui %0 : i1 to i32
    %c0_i32_0 = arith.constant 0 : i32
    %2 = arith.cmpi ne, %1, %c0_i32_0 : i32
    scf.if %2 {
      %cst_17 = arith.constant 0.000000e+00 : f32
      %22 = vector.broadcast %cst_17 : f32 to vector<8x128xf32>
      %c0_18 = arith.constant 0 : index
      %c0_19 = arith.constant 0 : index
      %23 = vector.load %arg7[%c0_18, %c0_19] : memref<8x128xf32, #tpu.memory_space<vmem>>, vector<8x128xf32>
      tpu.vector_store %arg7[%c0_18, %c0_19], %22 {strides = array<i32>} : memref<8x128xf32, #tpu.memory_space<vmem>>, vector<8x128xf32>,
      %cst_20 = arith.constant 0.000000e+00 : f32
      %24 = vector.broadcast %cst_20 : f32 to vector<8x128xf32>
      %c0_21 = arith.constant 0 : index
      %c0_22 = arith.constant 0 : index
      %25 = vector.load %arg8[%c0_21, %c0_22] : memref<8x128xf32, #tpu.memory_space<vmem>>, vector<8x128xf32>
      tpu.vector_store %arg8[%c0_21, %c0_22], %24 {strides = array<i32>} : memref<8x128xf32, #tpu.memory_space<vmem>>, vector<8x128xf32>,
    } else {
    }
    %c0 = arith.constant 0 : index
    %c0_1 = arith.constant 0 : index
    %c0_2 = arith.constant 0 : index
    %3 = vector.load %arg3[%c0, %c0_1, %c0_2] : memref<1x8x128xf32, #tpu.memory_space<vmem>>, vector<1x8x128xf32>
    %4 = vector.shape_cast %3 : vector<1x8x128xf32> to vector<8x128xf32>
    %c0_3 = arith.constant 0 : index
    %c0_4 = arith.constant 0 : index
    %c0_5 = arith.constant 0 : index
    %5 = vector.load %arg4[%c0_3, %c0_4, %c0_5] : memref<1x8x128xf32, #tpu.memory_space<vmem>>, vector<1x8x128xf32>
    %6 = vector.shape_cast %5 : vector<1x8x128xf32> to vector<8x128xf32>
    %7 = vector.shape_cast %4 : vector<8x128xf32> to vector<1x8x128xf32>
    %8 = vector.shape_cast %6 : vector<8x128xf32> to vector<1x8x128xf32>
    %c0_6 = arith.constant 0 : index
    %c0_7 = arith.constant 0 : index
    %9 = vector.load %arg7[%c0_6, %c0_7] : memref<8x128xf32, #tpu.memory_space<vmem>>, vector<8x128xf32>
    %10 = arith.mulf %7, %8 : vector<1x8x128xf32>
    %cst = arith.constant dense<0.000000e+00> : vector<8x128xf32>
    %11 = vector.multi_reduction <add>, %10, %cst [0] : vector<1x8x128xf32> to vector<8x128xf32>
    %12 = arith.addf %9, %11 : vector<8x128xf32>
    %c0_8 = arith.constant 0 : index
    %c0_9 = arith.constant 0 : index
    %13 = vector.load %arg7[%c0_8, %c0_9] : memref<8x128xf32, #tpu.memory_space<vmem>>, vector<8x128xf32>
    tpu.vector_store %arg7[%c0_8, %c0_9], %12 {strides = array<i32>} : memref<8x128xf32, #tpu.memory_space<vmem>>, vector<8x128xf32>,
    %c0_10 = arith.constant 0 : index
    %c0_11 = arith.constant 0 : index
    %14 = vector.load %arg8[%c0_10, %c0_11] : memref<8x128xf32, #tpu.memory_space<vmem>>, vector<8x128xf32>
    %15 = arith.addf %7, %8 : vector<1x8x128xf32>
    %cst_12 = arith.constant dense<0.000000e+00> : vector<8x128xf32>
    %16 = vector.multi_reduction <add>, %15, %cst_12 [0] : vector<1x8x128xf32> to vector<8x128xf32>
    %17 = arith.addf %14, %16 : vector<8x128xf32>
    %c0_13 = arith.constant 0 : index
    %c0_14 = arith.constant 0 : index
    %18 = vector.load %arg8[%c0_13, %c0_14] : memref<8x128xf32, #tpu.memory_space<vmem>>, vector<8x128xf32>
    tpu.vector_store %arg8[%c0_13, %c0_14], %17 {strides = array<i32>} : memref<8x128xf32, #tpu.memory_space<vmem>>, vector<8x128xf32>,
    %c0_i32_15 = arith.constant 0 : i32
    %19 = arith.cmpi eq, %arg2, %c0_i32_15 : i32
    %20 = arith.extui %19 : i1 to i32
    %c0_i32_16 = arith.constant 0 : i32
    %21 = arith.cmpi ne, %20, %c0_i32_16 : i32
    scf.if %21 {
      %c0_17 = arith.constant 0 : index
      %c0_18 = arith.constant 0 : index
      %22 = vector.load %arg7[%c0_17, %c0_18] : memref<8x128xf32, #tpu.memory_space<vmem>>, vector<8x128xf32>
      %c0_19 = arith.constant 0 : index
      %c0_20 = arith.constant 0 : index
      %c0_21 = arith.constant 0 : index
      %c0_22 = arith.constant 0 : index
      %23 = vector.load %arg5[%c0_19, %c0_20, %c0_21, %c0_22] : memref<1x1x8x128xf32, #tpu.memory_space<vmem>>, vector<1x1x8x128xf32>
      %24 = vector.shape_cast %23 : vector<1x1x8x128xf32> to vector<8x128xf32>
      %25 = vector.shape_cast %22 : vector<8x128xf32> to vector<1x1x8x128xf32>
      tpu.vector_store %arg5[%c0_19, %c0_20, %c0_21, %c0_22], %25 {strides = array<i32>} : memref<1x1x8x128xf32, #tpu.memory_space<vmem>>, vector<1x1x8x128xf32>,
      %c0_23 = arith.constant 0 : index
      %c0_24 = arith.constant 0 : index
      %26 = vector.load %arg8[%c0_23, %c0_24] : memref<8x128xf32, #tpu.memory_space<vmem>>, vector<8x128xf32>
      %c0_25 = arith.constant 0 : index
      %c0_26 = arith.constant 0 : index
      %c0_27 = arith.constant 0 : index
      %c0_28 = arith.constant 0 : index
      %27 = vector.load %arg6[%c0_25, %c0_26, %c0_27, %c0_28] : memref<1x1x8x128xf32, #tpu.memory_space<vmem>>, vector<1x1x8x128xf32>
      %28 = vector.shape_cast %27 : vector<1x1x8x128xf32> to vector<8x128xf32>
      %29 = vector.shape_cast %26 : vector<8x128xf32> to vector<1x1x8x128xf32>
      tpu.vector_store %arg6[%c0_25, %c0_26, %c0_27, %c0_28], %29 {strides = array<i32>} : memref<1x1x8x128xf32, #tpu.memory_space<vmem>>, vector<1x1x8x128xf32>,
    } else {
    }
    return
  }
  func.func @transform_0(%arg0: i32, %arg1: i32, %arg2: i32) -> (i32, i32, i32) {
    %c1_i32 = arith.constant 1 : i32
    %0 = arith.muli %arg0, %c1_i32 : i32
    %1 = arith.addi %0, %arg2 : i32
    %c0_i32 = arith.constant 0 : i32
    %c0_i32_0 = arith.constant 0 : i32
    return %arg1, %1, %c0_i32 : i32, i32, i32
  }
  func.func @transform_1(%arg0: i32, %arg1: i32, %arg2: i32) -> (i32, i32, i32) {
    %c1_i32 = arith.constant 1 : i32
    %0 = arith.muli %arg0, %c1_i32 : i32
    %1 = arith.addi %0, %arg2 : i32
    %c0_i32 = arith.constant 0 : i32
    %c0_i32_0 = arith.constant 0 : i32
    return %arg1, %1, %c0_i32 : i32, i32, i32
  }
  func.func @transform_2(%arg0: i32, %arg1: i32, %arg2: i32) -> (i32, i32, i32, i32) {
    %c0_i32 = arith.constant 0 : i32
    %c0_i32_0 = arith.constant 0 : i32
    %c0_i32_1 = arith.constant 0 : i32
    return %arg0, %arg1, %c0_i32, %c0_i32_0 : i32, i32, i32, i32
  }
  func.func @transform_3(%arg0: i32, %arg1: i32, %arg2: i32) -> (i32, i32, i32, i32) {
    %c0_i32 = arith.constant 0 : i32
    %c0_i32_0 = arith.constant 0 : i32
    %c0_i32_1 = arith.constant 0 : i32
    return %arg0, %arg1, %c0_i32, %c0_i32_0 : i32, i32, i32, i32
  }
}

</mosaic_0001>

<llo_original>
// kernel: dice_loss.1
$region0: #{dice_loss.1}
  #allocation0 [shape = 'u32[]', space=smem, size = 0x4, offset = 0x4, fixed_abs, tag = 'smem constant byte address 0x4 - core index']
  #allocation1 [shape = 'u32[144,128]{1,0:T(1,128)}', space=vmem, size = 0x12000, scoped, tag = 'internal scratch']
  #allocation2 [shape = 'f32[8,128]{1,0:T(8,128)}', space=vmem, size = 0x1000, scoped, tag = 'scratch operand']
  #allocation3 [shape = 'f32[8,128]{1,0:T(8,128)}', space=vmem, size = 0x1000, scoped, tag = 'scratch operand']
  %s0 = inlined_call_operand.vmem [shape: f32[2,8,128], index: 0, kind: input, shape index: {}]
  %s1 = inlined_call_operand.vmem [shape: f32[2,8,128], index: 1, kind: input, shape index: {}]
  %s2 = inlined_call_operand.vmem [shape: f32[1,2,8,128], index: 2, kind: output, shape index: {0}]
  %s3 = inlined_call_operand.vmem [shape: f32[1,2,8,128], index: 3, kind: output, shape index: {1}]
  %4 = xla_tuple %s2, %s3
  %s5 = sld [smem:[#allocation0]]
  $region57: #{dice_loss.1} parent=0
    _
  %s7 = ssub.s32 1, %s5
  %s8 = scalar_select 0, %s7, %s5
  loop: start=0, step=1, limit=4
  $region2: #{dice_loss.1} parent=0 // loop_pre_header
    _
  $region3: #{dice_loss.1} parent=0 // loop_header
    %s10 = sphi 0, %s14
    %p11 = scmp.ge.s32.totalorder %s10, 4
    %s17 = sphi 0, %s36
    %s18 = sphi 0, %s32
    %s19 = sphi 0, %s28
    %s20 = sphi 0, %s17
    %s21 = sphi 0, %s18
    %s22 = sphi 0, %s19
    %s23 = sphi 0, %s20
    %s24 = sphi 0, %s21
    %s25 = sphi 0, %s22
    %s43 = sphi 0, %s45
    %s46 = sphi 0, %s43
    %s47 = sphi 0, %s46
    %s63 = sphi 0, %s47
    %s73 = sphi 0, %s75
    %s76 = sphi 0, %s73
    %s77 = sphi 0, %s76
    %s93 = sphi 0, %s77
    %s101 = sphi 0, %s103
    %s104 = sphi 0, %s101
    %s105 = sphi 0, %s104
    %s121 = sphi 0, %s105
    %s129 = sphi 0, %s131
    %s132 = sphi 0, %s129
    %s133 = sphi 0, %s132
    %s149 = sphi 0, %s133
  $region4: #{dice_loss.1} parent=0 // loop_header_branch
    %13 = sbr.rel (%p11) target = $region8
  $region5: #{dice_loss.1} parent=0 // loop_body
    %s15 = ssub.s32 %s10, 1
    %s16 = ssub.s32 %s10, 2
    %s26 = sadd.s32 1, %s19
    %p27 = scmp.ge.s32.totalorder %s26, 1
    %s28 = scalar_select %p27, 0, %s26
    %s29 = sadd.s32 1, %s18
    %s30 = scalar_select %p27, %s29, %s18
    %p31 = scmp.ge.s32.totalorder %s30, 2
    %s32 = scalar_select %p31, 0, %s30
    %s33 = sadd.s32 1, %s17
    %s34 = scalar_select %p31, %s33, %s17
    %p35 = scmp.ge.s32.totalorder %s34, 1
    %s36 = scalar_select %p35, 0, %s34
    %s37 = sadd.s32 %s17, %s19
    %s38 = sadd.s32 %s36, %s28
    %s39 = ssub.s32 %s18, %s32
    %s40 = ssub.s32 %s37, %s38
    %s41 = sor.u32 %s39, %s40
    %p42 = scmp.eq.s32.totalorder %s41, 0
    %s44 = sadd.s32 %s43, 1
    %s45 = scalar_select %p42, %s43, %s44
    %p48 = pneg %p42
    %p49 = scmp.eq.s32.totalorder %s10, 1
    %p50 = por %p48, %p49
    %p51 = scmp.ne.s32.totalorder %s43, %s46
    %p52 = scmp.eq.s32.totalorder %s10, 0
    %p53 = por %p51, %p52
    %p54 = scmp.ne.s32.totalorder %s43, %s46
    %p55 = scmp.eq.s32.totalorder %s15, 1
    %p56 = por %p54, %p55
    %p57 = scmp.ne.s32.totalorder %s46, %s47
    %p58 = scmp.eq.s32.totalorder %s15, 0
    %p59 = por %p57, %p58
    %p60 = scmp.ne.s32.totalorder %s46, %s47
    %p61 = scmp.eq.s32.totalorder %s16, 1
    %p62 = por %p60, %p61
    %p64 = scmp.ne.s32.totalorder %s47, %s63
    %p65 = scmp.eq.s32.totalorder %s16, 0
    %p66 = por %p64, %p65
    %s67 = sadd.s32 %s17, %s19
    %s68 = sadd.s32 %s36, %s28
    %s69 = ssub.s32 %s18, %s32
    %s70 = ssub.s32 %s67, %s68
    %s71 = sor.u32 %s69, %s70
    %p72 = scmp.eq.s32.totalorder %s71, 0
    %s74 = sadd.s32 %s73, 1
    %s75 = scalar_select %p72, %s73, %s74
    %p78 = pneg %p72
    %p79 = scmp.eq.s32.totalorder %s10, 1
    %p80 = por %p78, %p79
    %p81 = scmp.ne.s32.totalorder %s73, %s76
    %p82 = scmp.eq.s32.totalorder %s10, 0
    %p83 = por %p81, %p82
    %p84 = scmp.ne.s32.totalorder %s73, %s76
    %p85 = scmp.eq.s32.totalorder %s15, 1
    %p86 = por %p84, %p85
    %p87 = scmp.ne.s32.totalorder %s76, %s77
    %p88 = scmp.eq.s32.totalorder %s15, 0
    %p89 = por %p87, %p88
    %p90 = scmp.ne.s32.totalorder %s76, %s77
    %p91 = scmp.eq.s32.totalorder %s16, 1
    %p92 = por %p90, %p91
    %p94 = scmp.ne.s32.totalorder %s77, %s93
    %p95 = scmp.eq.s32.totalorder %s16, 0
    %p96 = por %p94, %p95
    %s97 = ssub.s32 %s17, %s36
    %s98 = ssub.s32 %s18, %s32
    %s99 = sor.u32 %s97, %s98
    %p100 = scmp.eq.s32.totalorder %s99, 0
    %s102 = sadd.s32 %s101, 1
    %s103 = scalar_select %p100, %s101, %s102
    %p106 = pneg %p100
    %p107 = scmp.eq.s32.totalorder %s10, 1
    %p108 = por %p106, %p107
    %p109 = scmp.ne.s32.totalorder %s101, %s104
    %p110 = scmp.eq.s32.totalorder %s10, 0
    %p111 = por %p109, %p110
    %p112 = scmp.ne.s32.totalorder %s101, %s104
    %p113 = scmp.eq.s32.totalorder %s15, 1
    %p114 = por %p112, %p113
    %p115 = scmp.ne.s32.totalorder %s104, %s105
    %p116 = scmp.eq.s32.totalorder %s15, 0
    %p117 = por %p115, %p116
    %p118 = scmp.ne.s32.totalorder %s104, %s105
    %p119 = scmp.eq.s32.totalorder %s16, 1
    %p120 = por %p118, %p119
    %p122 = scmp.ne.s32.totalorder %s105, %s121
    %p123 = scmp.eq.s32.totalorder %s16, 0
    %p124 = por %p122, %p123
    %s125 = ssub.s32 %s17, %s36
    %s126 = ssub.s32 %s18, %s32
    %s127 = sor.u32 %s125, %s126
    %p128 = scmp.eq.s32.totalorder %s127, 0
    %s130 = sadd.s32 %s129, 1
    %s131 = scalar_select %p128, %s129, %s130
    %p134 = pneg %p128
    %p135 = scmp.eq.s32.totalorder %s10, 1
    %p136 = por %p134, %p135
    %p137 = scmp.ne.s32.totalorder %s129, %s132
    %p138 = scmp.eq.s32.totalorder %s10, 0
    %p139 = por %p137, %p138
    %p140 = scmp.ne.s32.totalorder %s129, %s132
    %p141 = scmp.eq.s32.totalorder %s15, 1
    %p142 = por %p140, %p141
    %p143 = scmp.ne.s32.totalorder %s132, %s133
    %p144 = scmp.eq.s32.totalorder %s15, 0
    %p145 = por %p143, %p144
    %p146 = scmp.ne.s32.totalorder %s132, %s133
    %p147 = scmp.eq.s32.totalorder %s16, 1
    %p148 = por %p146, %p147
    %p150 = scmp.ne.s32.totalorder %s133, %s149
    %p151 = scmp.eq.s32.totalorder %s16, 0
    %p152 = por %p150, %p151
    %p153 = scmp.le.s32.totalorder 1, %s10
    %p154 = scmp.lt.s32.totalorder %s10, 3
    %p155 = pnand %p153, %p154
    %p156 = pneg %p155
    // Predicated region
    $region9: #{dice_loss.1} parent=5 // pred_check
      _
    $region10: #{dice_loss.1} parent=5 // pred_check_branch
      %158 = sbr.rel (%p155) target = $region12
    $region11: #{dice_loss.1} parent=5 // pred_region
      %s159 = ssub.s32 %s10, 1
    $region12: #{dice_loss.1} parent=5 // pred_fallthru
      _
    %p160 = scmp.lt.s32.totalorder %s10, 2
    // Predicated region
    $region13: #{dice_loss.1} parent=5 // pred_check
      %p161 = pneg %p160
    $region14: #{dice_loss.1} parent=5 // pred_check_branch
      %163 = sbr.rel (%p161) target = $region16
    $region15: #{dice_loss.1} parent=5 // pred_region
      // Predicated region
      $region17: #{dice_loss.1} parent=15 // pred_check
        %p164 = pneg %p53
      $region18: #{dice_loss.1} parent=15 // pred_check_branch
        %166 = sbr.rel (%p164) target = $region20
      $region19: #{dice_loss.1} parent=15 // pred_region
        %s167 = sadd.s32 %s17, %s19
        %p168 = scmp.lt.s32.totalorder %s18, 1
        %s169 = scalar_select %p168, %s18, 1
        %p170 = scmp.lt.s32.totalorder %s167, 0
        %s171 = scalar_select %p170, %s167, 0
        %s172 = sadd.s32 %s171, %s169
        %s173 = smul.addr %s172, 8
        %s174 = scalar_lea.vmem %s0, %s173
        %s175 = sadd.s32 %s17, %s19
      $region20: #{dice_loss.1} parent=15 // pred_fallthru
        _
      // Predicated region
      $region21: #{dice_loss.1} parent=15 // pred_check
        %p176 = pneg %p83
      $region22: #{dice_loss.1} parent=15 // pred_check_branch
        %178 = sbr.rel (%p176) target = $region24
      $region23: #{dice_loss.1} parent=15 // pred_region
        %s179 = sadd.s32 %s17, %s19
        %p180 = scmp.lt.s32.totalorder %s18, 1
        %s181 = scalar_select %p180, %s18, 1
        %p182 = scmp.lt.s32.totalorder %s179, 0
        %s183 = scalar_select %p182, %s179, 0
        %s184 = sadd.s32 %s183, %s181
        %s185 = smul.addr %s184, 8
        %s186 = scalar_lea.vmem %s1, %s185
        %s187 = sadd.s32 %s17, %s19
      $region24: #{dice_loss.1} parent=15 // pred_fallthru
        _
    $region16: #{dice_loss.1} parent=5 // pred_fallthru
      _
    %p188 = scmp.le.s32.totalorder 1, %s10
    %p189 = scmp.lt.s32.totalorder %s10, 3
    %p190 = pnand %p188, %p189
    %p191 = pneg %p190
    // Predicated region
    $region25: #{dice_loss.1} parent=5 // pred_check
      _
    $region26: #{dice_loss.1} parent=5 // pred_check_branch
      %193 = sbr.rel (%p190) target = $region28
    $region27: #{dice_loss.1} parent=5 // pred_region
      %s194 = ssub.s32 %s10, 1
      %s195 = sadd.s32 %s20, %s22
      %p196 = scmp.lt.s32.totalorder %s21, 1
      %s197 = scalar_select %p196, %s21, 1
      %p198 = scmp.lt.s32.totalorder %s195, 0
      %s199 = scalar_select %p198, %s195, 0
      %s200 = sadd.s32 %s199, %s197
      %s201 = smul.addr %s200, 8
      %s202 = scalar_lea.vmem %s0, %s201
      %p203 = pneg %p59
      %p204 = pneg %p56
      %s205 = sadd.s32 %s20, %s22
      %p206 = scmp.lt.s32.totalorder %s21, 1
      %s207 = scalar_select %p206, %s21, 1
      %p208 = scmp.lt.s32.totalorder %s205, 0
      %s209 = scalar_select %p208, %s205, 0
      %s210 = sadd.s32 %s209, %s207
      %s211 = smul.addr %s210, 8
      %s212 = scalar_lea.vmem %s1, %s211
      %p213 = pneg %p89
      %p214 = pneg %p86
      %p215 = pneg %p117
      %p216 = pneg %p114
      %p217 = scmp.lt.s32.totalorder %s20, 0
      %s218 = scalar_select %p217, %s20, 0
      %p219 = scmp.lt.s32.totalorder %s21, 1
      %s220 = scalar_select %p219, %s21, 1
      %s221 = smul.addr %s218, 2
      %s222 = sadd.s32 %s220, %s221
      %s223 = smul.addr %s222, 8
      %s224 = scalar_lea.vmem %s2, %s223
      %p225 = pneg %p145
      %p226 = pneg %p142
      %p227 = scmp.lt.s32.totalorder %s20, 0
      %s228 = scalar_select %p227, %s20, 0
      %p229 = scmp.lt.s32.totalorder %s21, 1
      %s230 = scalar_select %p229, %s21, 1
      %s231 = smul.addr %s228, 2
      %s232 = sadd.s32 %s230, %s231
      %s233 = smul.addr %s232, 8
      %s234 = scalar_lea.vmem %s3, %s233
      %s235 = sadd.s32 %s20, %s22
      %p236 = scmp.lt.s32.totalorder %s21, 1
      %s237 = scalar_select %p236, %s21, 1
      %p238 = scmp.lt.s32.totalorder %s235, 0
      %s239 = scalar_select %p238, %s235, 0
      %s240 = sadd.s32 %s239, %s237
      %s241 = smul.addr %s240, 8
      %s242 = scalar_lea.vmem %s0, %s241
      %s243 = sadd.s32 %s20, %s22
      %s244 = sadd.s32 %s20, %s22
      %p245 = scmp.lt.s32.totalorder %s21, 1
      %s246 = scalar_select %p245, %s21, 1
      %p247 = scmp.lt.s32.totalorder %s244, 0
      %s248 = scalar_select %p247, %s244, 0
      %s249 = sadd.s32 %s248, %s246
      %s250 = smul.addr %s249, 8
      %s251 = scalar_lea.vmem %s1, %s250
      %s252 = sadd.s32 %s20, %s22
      %p253 = scmp.lt.s32.totalorder %s20, 0
      %s254 = scalar_select %p253, %s20, 0
      %p255 = scmp.lt.s32.totalorder %s21, 1
      %s256 = scalar_select %p255, %s21, 1
      %s257 = smul.addr %s254, 2
      %s258 = sadd.s32 %s256, %s257
      %s259 = smul.addr %s258, 8
      %s260 = scalar_lea.vmem %s2, %s259
      %p261 = scmp.lt.s32.totalorder %s20, 0
      %s262 = scalar_select %p261, %s20, 0
      %p263 = scmp.lt.s32.totalorder %s21, 1
      %s264 = scalar_select %p263, %s21, 1
      %s265 = smul.addr %s262, 2
      %s266 = sadd.s32 %s264, %s265
      %s267 = smul.addr %s266, 8
      %s268 = scalar_lea.vmem %s3, %s267
      %p269 = scmp.eq.s32.totalorder %s22, 0
      // Predicated region
      $region29: #{dice_loss.1} parent=27 // pred_check
        %p270 = pneg %p269
      $region30: #{dice_loss.1} parent=27 // pred_check_branch
        %272 = sbr.rel (%p270) target = $region32
      $region31: #{dice_loss.1} parent=27 // pred_region
        %273 = vst [vmem:[#allocation2] sm:$0xff] 0.0
        %274 = vst [vmem:[#allocation3] sm:$0xff] 0.0
      $region32: #{dice_loss.1} parent=27 // pred_fallthru
        _
      %v275 = vld [vmem:[%s242] sm:$0xff]
      %v276 = vld [vmem:[%s251] sm:$0xff]
      %v277 = vld [vmem:[#allocation2] sm:$0xff]
      %v278 = vmul.f32 %v275, %v276
      %v279 = vadd.f32 %v278, 0.0
      %v280 = vadd.f32 %v277, %v279
      %281 = vst [vmem:[#allocation2] sm:$0xff] %v280
      %v282 = vld [vmem:[#allocation3] sm:$0xff]
      %v283 = vadd.f32 %v275, %v276
      %v284 = vadd.f32 %v283, 0.0
      %v285 = vadd.f32 %v282, %v284
      %286 = vst [vmem:[#allocation3] sm:$0xff] %v285
      // Predicated region
      $region33: #{dice_loss.1} parent=27 // pred_check
        %p287 = pneg %p269
      $region34: #{dice_loss.1} parent=27 // pred_check_branch
        %289 = sbr.rel (%p287) target = $region36
      $region35: #{dice_loss.1} parent=27 // pred_region
        %v290 = vld [vmem:[#allocation2] sm:$0xff]
        %291 = vst [vmem:[%s260] sm:$0xff] %v290
        %v292 = vld [vmem:[#allocation3] sm:$0xff]
        %293 = vst [vmem:[%s268] sm:$0xff] %v292
      $region36: #{dice_loss.1} parent=27 // pred_fallthru
        _
      %p294 = scmp.lt.s32.totalorder %s20, 0
      %s295 = scalar_select %p294, %s20, 0
      %p296 = scmp.lt.s32.totalorder %s21, 1
      %s297 = scalar_select %p296, %s21, 1
      %s298 = smul.addr %s295, 2
      %s299 = sadd.s32 %s297, %s298
      %s300 = smul.addr %s299, 8
      %s301 = scalar_lea.vmem %s2, %s300
      %p302 = scmp.lt.s32.totalorder %s20, 0
      %s303 = scalar_select %p302, %s20, 0
      %p304 = scmp.lt.s32.totalorder %s21, 1
      %s305 = scalar_select %p304, %s21, 1
      %s306 = smul.addr %s303, 2
      %s307 = sadd.s32 %s305, %s306
      %s308 = smul.addr %s307, 8
      %s309 = scalar_lea.vmem %s3, %s308
      // Predicated region
      $region37: #{dice_loss.1} parent=27 // pred_check
        %p310 = pneg %p114
      $region38: #{dice_loss.1} parent=27 // pred_check_branch
        %312 = sbr.rel (%p310) target = $region40
      $region39: #{dice_loss.1} parent=27 // pred_region
        _
      $region40: #{dice_loss.1} parent=27 // pred_fallthru
        _
      // Predicated region
      $region41: #{dice_loss.1} parent=27 // pred_check
        %p313 = pneg %p142
      $region42: #{dice_loss.1} parent=27 // pred_check_branch
        %315 = sbr.rel (%p313) target = $region44
      $region43: #{dice_loss.1} parent=27 // pred_region
        _
      $region44: #{dice_loss.1} parent=27 // pred_fallthru
        _
    $region28: #{dice_loss.1} parent=5 // pred_fallthru
      _
    %p316 = scmp.le.s32.totalorder 2, %s10
    // Predicated region
    $region45: #{dice_loss.1} parent=5 // pred_check
      %p317 = pneg %p316
    $region46: #{dice_loss.1} parent=5 // pred_check_branch
      %319 = sbr.rel (%p317) target = $region48
    $region47: #{dice_loss.1} parent=5 // pred_region
      %s320 = ssub.s32 %s10, 2
      // Predicated region
      $region49: #{dice_loss.1} parent=47 // pred_check
        %p321 = pneg %p120
      $region50: #{dice_loss.1} parent=47 // pred_check_branch
        %323 = sbr.rel (%p321) target = $region52
      $region51: #{dice_loss.1} parent=47 // pred_region
        %p324 = scmp.lt.s32.totalorder %s23, 0
        %s325 = scalar_select %p324, %s23, 0
        %p326 = scmp.lt.s32.totalorder %s24, 1
        %s327 = scalar_select %p326, %s24, 1
        %s328 = smul.addr %s325, 2
        %s329 = sadd.s32 %s327, %s328
        %s330 = smul.addr %s329, 8
        %s331 = scalar_lea.vmem %s2, %s330
      $region52: #{dice_loss.1} parent=47 // pred_fallthru
        _
      // Predicated region
      $region53: #{dice_loss.1} parent=47 // pred_check
        %p332 = pneg %p148
      $region54: #{dice_loss.1} parent=47 // pred_check_branch
        %334 = sbr.rel (%p332) target = $region56
      $region55: #{dice_loss.1} parent=47 // pred_region
        %p335 = scmp.lt.s32.totalorder %s23, 0
        %s336 = scalar_select %p335, %s23, 0
        %p337 = scmp.lt.s32.totalorder %s24, 1
        %s338 = scalar_select %p337, %s24, 1
        %s339 = smul.addr %s336, 2
        %s340 = sadd.s32 %s338, %s339
        %s341 = smul.addr %s340, 8
        %s342 = scalar_lea.vmem %s3, %s341
      $region56: #{dice_loss.1} parent=47 // pred_fallthru
        _
    $region48: #{dice_loss.1} parent=5 // pred_fallthru
      _
  $region6: #{dice_loss.1} parent=0 // loop_footer
    %s14 = sadd.s32 1, %s10
  $region7: #{dice_loss.1} parent=0 // loop_footer_branch
    %9 = sbr.rel target = $region3
  $region8: #{dice_loss.1} parent=0 // loop_exit
    _

</llo_original>
